<compile_context>
chip_gen: v7x
topology: tpu7x:2x2x1
jax: 0.10.0
libtpu: 0.0.40
codegen_flags: <defaults>
</compile_context>

<pallas_src>
import jax
import jax.numpy as jnp
from jax.experimental import pallas as pl
from jax.experimental.pallas import tpu as pltpu

LN_EPS = 1e-5  # torch.nn.LayerNorm default eps


def _round_up(x, m):
    return ((x + m - 1) // m) * m


def _layout(num_states, num_actions, l1_dim, l2_dim):
    """Row/lane layout of the packed slabs (everything 8-sublane aligned)."""
    assert l1_dim % 8 == 0 and l2_dim % 8 == 0, "l1_dim/l2_dim must be multiples of 8"
    s_pad = _round_up(num_states, 8)          # state rows [0, num_states)
    a_pad = _round_up(num_actions, 8)         # action rows [s_pad, s_pad+num_actions)
    l12 = l1_dim + l2_dim
    # K of the fused first matmul == lane width of the weight slab; padded so
    # the fused weight, FC2^T and the wq row are all full-width/prefix views.
    d_lane = max(_round_up(s_pad + a_pad, 8), l1_dim, l2_dim)
    w2_off = l12                               # rows [w2_off, w2_off+l2): FC2^T
    wq_off = l12 + l2_dim                      # row wq_off: Q-head weight row
    wrows = wq_off + 8
    return s_pad, a_pad, d_lane, w2_off, wq_off, wrows


def _make_kernel(num_states, num_actions, l1, l2, w2_off, wq_off):
    l12 = l1 + l2
    inv_l1 = 1.0 / float(l1)
    inv_l2 = 1.0 / float(l2)

    def layernorm(x, gamma_col, beta_col, inv_n, d):
        # Feature axis (sublanes) reductions done on the otherwise-idle MXU:
        # ones[1, d] @ x gives a lane-dense [1, tb] sum.  Two-pass (centered)
        # variance for PyTorch-grade numerics.
        ones_row = jnp.ones((1, d), jnp.float32)
        mean = jnp.dot(ones_row, x, preferred_element_type=jnp.float32) * inv_n
        xc = x - mean                                           # [d, tb]
        var = jnp.dot(ones_row, xc * xc,
                      preferred_element_type=jnp.float32) * inv_n
        return xc * jax.lax.rsqrt(var + LN_EPS) * gamma_col + beta_col

    def kernel(xin_ref, wslab_ref, vslab_ref, out_ref):
        x = xin_ref[...]                                        # [K, tb]
        wf = wslab_ref[0:l12, :]                                # [l1+l2, K] block-diag
        w2 = wslab_ref[w2_off:w2_off + l2, 0:l1]                # [l2, l1]
        wq = wslab_ref[wq_off:wq_off + 1, 0:l2]                 # [1, l2]

        v = vslab_ref[...]                                      # [l1+l2, 8]
        bfused = v[:, 0:1]                                      # [b1; ba]
        g1, be1 = v[0:l1, 1:2], v[0:l1, 2:3]
        b2, g2, be2 = v[0:l2, 3:4], v[0:l2, 4:5], v[0:l2, 5:6]
        bq = v[0:1, 6:7]

        # Fused first layer: [FC1(state); action_value(action)] in one MXU pass.
        fused = jnp.dot(wf, x, preferred_element_type=jnp.float32) + bfused
        sv = fused[0:l1, :]                                     # FC1(state) + b1
        av = jnp.maximum(fused[l1:l12, :], 0.0)                 # relu(action branch)

        # State branch: LN -> relu -> FC2 -> LN (no relu after, as in PyTorch).
        sv = layernorm(sv, g1, be1, inv_l1, l1)
        sv = jnp.maximum(sv, 0.0)
        sv = jnp.dot(w2, sv, preferred_element_type=jnp.float32) + b2
        sv = layernorm(sv, g2, be2, inv_l2, l2)

        # Combine + Q head on the MXU: [1, l2] @ [l2, tb] -> lane-dense [1, tb].
        sav = jnp.maximum(sv + av, 0.0)
        out_ref[...] = jnp.dot(wq, sav, preferred_element_type=jnp.float32) + bq

    return kernel


def make_critic_forward(num_states, num_actions, l1_dim, l2_dim, tile_b=4096):
    s_pad, a_pad, d_lane, w2_off, wq_off, wrows = _layout(
        num_states, num_actions, l1_dim, l2_dim)
    tile_b = max(128, _round_up(tile_b, 128))
    l12 = l1_dim + l2_dim
    kernel = _make_kernel(num_states, num_actions, l1_dim, l2_dim, w2_off, wq_off)

    @jax.jit
    def forward(state, action, wslab, vslab):
        batch = state.shape[0]
        # Aim for >=2 "parallel" grid steps when the batch allows, so v7x's
        # second TensorCore has work; lane tiles must be multiples of 128.
        half = _round_up((batch + 1) // 2, 128)
        tb = min(tile_b, max(128, half))
        padded = _round_up(batch, tb)

        # Pack [state | action] feature-major into one [K, padded] slab
        # (one activation DMA per grid step; unused rows stay zero).
        xin = jnp.zeros((d_lane, padded), jnp.float32)
        xin = xin.at[0:num_states, 0:batch].set(state.astype(jnp.float32).T)
        xin = xin.at[s_pad:s_pad + num_actions, 0:batch].set(
            action.astype(jnp.float32).T)

        out = pl.pallas_call(
            kernel,
            out_shape=jax.ShapeDtypeStruct((1, padded), jnp.float32),
            grid=(padded // tb,),
            in_specs=[
                pl.BlockSpec((d_lane, tb), lambda i: (0, i)),      # activations
                pl.BlockSpec((wrows, d_lane), lambda i: (0, 0)),   # resident weights
                pl.BlockSpec((l12, 8), lambda i: (0, 0)),          # resident vectors
            ],
            out_specs=pl.BlockSpec((1, tb), lambda i: (0, i)),     # lane-dense q row
            compiler_params=pltpu.CompilerParams(
                dimension_semantics=("parallel",)),
        )(xin, wslab, vslab)
        return out[0, :batch][:, None]

    return forward


def pack_params(params):
    """Pack the 12 parameter tensors into (weight_slab, vector_slab)."""
    num_states, l1 = params["w1"].shape
    num_actions, l2 = params["wa"].shape
    s_pad, a_pad, d_lane, w2_off, wq_off, wrows = _layout(
        num_states, num_actions, l1, l2)
    l12 = l1 + l2

    wslab = jnp.zeros((wrows, d_lane), jnp.float32)
    # Block-diagonal fused first-layer weight (transposed, [out, in]).
    wslab = wslab.at[0:l1, 0:num_states].set(params["w1"].T.astype(jnp.float32))
    wslab = wslab.at[l1:l12, s_pad:s_pad + num_actions].set(
        params["wa"].T.astype(jnp.float32))
    wslab = wslab.at[w2_off:w2_off + l2, 0:l1].set(params["w2"].T.astype(jnp.float32))
    wslab = wslab.at[wq_off, 0:l2].set(params["wq"].reshape(-1).astype(jnp.float32))

    vslab = jnp.zeros((l12, 8), jnp.float32)
    vslab = vslab.at[0:l1, 0].set(params["b1"].reshape(-1).astype(jnp.float32))
    vslab = vslab.at[l1:l12, 0].set(params["ba"].reshape(-1).astype(jnp.float32))
    vslab = vslab.at[0:l1, 1].set(params["g1"].reshape(-1).astype(jnp.float32))
    vslab = vslab.at[0:l1, 2].set(params["be1"].reshape(-1).astype(jnp.float32))
    vslab = vslab.at[0:l2, 3].set(params["b2"].reshape(-1).astype(jnp.float32))
    vslab = vslab.at[0:l2, 4].set(params["g2"].reshape(-1).astype(jnp.float32))
    vslab = vslab.at[0:l2, 5].set(params["be2"].reshape(-1).astype(jnp.float32))
    vslab = vslab.at[0, 6].set(params["bq"].reshape(()).astype(jnp.float32))
    return wslab, vslab


def init_params(key, num_states, num_actions, l1_dim, l2_dim):
    """Uniform init mirroring the module's init ranges.

    (The original module re-initializes FC1 twice and leaves FC2 /
    action_value with the default init; forward semantics don't depend on the
    exact values, so we use one uniform range per layer.)
    """
    ks = jax.random.split(key, 8)
    f1 = 1.0 / jnp.sqrt(l1_dim)
    f2 = 1.0 / jnp.sqrt(l2_dim)
    fa = 1.0 / jnp.sqrt(num_actions)
    f3 = 0.003
    u = lambda k, shape, lim: jax.random.uniform(
        k, shape, jnp.float32, minval=-lim, maxval=lim)
    return {
        # weights stored [in, out]; wq stored as a [1, l2] row; bq [1, 1].
        "w1": u(ks[0], (num_states, l1_dim), f2),
        "b1": u(ks[1], (1, l1_dim), f2),
        "g1": jnp.ones((1, l1_dim), jnp.float32),
        "be1": jnp.zeros((1, l1_dim), jnp.float32),
        "w2": u(ks[2], (l1_dim, l2_dim), f1),
        "b2": u(ks[3], (1, l2_dim), f1),
        "g2": jnp.ones((1, l2_dim), jnp.float32),
        "be2": jnp.zeros((1, l2_dim), jnp.float32),
        "wa": u(ks[4], (num_actions, l2_dim), fa),
        "ba": u(ks[5], (1, l2_dim), fa),
        "wq": u(ks[6], (1, l2_dim), f3),
        "bq": u(ks[7], (1, 1), f3),
    }


def _ln_ref(x, gamma, beta):
    mean = jnp.mean(x, axis=-1, keepdims=True)
    var = jnp.mean((x - mean) ** 2, axis=-1, keepdims=True)
    return (x - mean) * jax.lax.rsqrt(var + LN_EPS) * gamma + beta


def reference_forward(state, action, p):
    """Pure-JAX reference (canonical LayerNorm formula) for a sanity check."""
    sv = state @ p["w1"] + p["b1"]
    sv = _ln_ref(sv, p["g1"], p["be1"])
    sv = jnp.maximum(sv, 0.0)
    sv = sv @ p["w2"] + p["b2"]
    sv = _ln_ref(sv, p["g2"], p["be2"])
    av = jnp.maximum(action @ p["wa"] + p["ba"], 0.0)
    sav = jnp.maximum(sv + av, 0.0)
    return jnp.sum(sav * p["wq"], axis=-1, keepdims=True) + p["bq"][0, 0]


if __name__ == "__main__":
    # Small shapes consistent with a DDPG critic for the ABB IRB-120 arm.
    batch, num_states, num_actions = 8, 12, 6
    l1_dim, l2_dim = 32, 32

    key = jax.random.PRNGKey(0)
    k_state, k_action, k_params = jax.random.split(key, 3)
    state = jax.random.normal(k_state, (batch, num_states), jnp.float32)
    action = jax.random.normal(k_action, (batch, num_actions), jnp.float32)
    params = init_params(k_params, num_states, num_actions, l1_dim, l2_dim)

    wslab, vslab = pack_params(params)
    critic_forward = make_critic_forward(num_states, num_actions, l1_dim, l2_dim)

    q = critic_forward(state, action, wslab, vslab)
    q = jax.block_until_ready(q)

    q_ref = reference_forward(state, action, params)
    assert q.shape == (batch, 1)
    assert jnp.allclose(q, q_ref, atol=5e-5, rtol=5e-4), \
        float(jnp.max(jnp.abs(q - q_ref)))

    print("KERNEL_OK")
</pallas_src>

<mosaic_0001>
module attributes {stable_mosaic.version = 11 : i64} {
  func.func @kernel(%arg0: i32, %arg1: memref<32x128xf32, #tpu.memory_space<vmem>>, %arg2: memref<104x32xf32, #tpu.memory_space<vmem>>, %arg3: memref<64x8xf32, #tpu.memory_space<vmem>>, %arg4: memref<1x128xf32, #tpu.memory_space<vmem>>) attributes {dimension_semantics = [#tpu.dimension_semantics<parallel>], iteration_bounds = array<i64: 1>, scalar_prefetch = 0 : i64, scratch_operands = 0 : i64, tpu.core_type = #tpu.core_type<tc>, window_params = [{transform_indices = @transform_0, window_bounds = array<i64: 32, 128>}, {pipeline_mode = #tpu.pipeline_mode<synchronous>, transform_indices = @transform_1, window_bounds = array<i64: 104, 32>}, {pipeline_mode = #tpu.pipeline_mode<synchronous>, transform_indices = @transform_2, window_bounds = array<i64: 64, 8>}, {transform_indices = @transform_3, window_bounds = array<i64: 1, 128>}]} {
    %c0 = arith.constant 0 : index
    %c0_0 = arith.constant 0 : index
    %0 = vector.load %arg1[%c0, %c0_0] : memref<32x128xf32, #tpu.memory_space<vmem>>, vector<32x128xf32>
    %c0_1 = arith.constant 0 : index
    %c0_2 = arith.constant 0 : index
    %1 = vector.load %arg2[%c0_1, %c0_2] : memref<104x32xf32, #tpu.memory_space<vmem>>, vector<64x32xf32>
    %c64 = arith.constant 64 : index
    %c0_3 = arith.constant 0 : index
    %2 = vector.load %arg2[%c64, %c0_3] : memref<104x32xf32, #tpu.memory_space<vmem>>, vector<32x32xf32>
    %c96 = arith.constant 96 : index
    %c0_4 = arith.constant 0 : index
    %3 = vector.load %arg2[%c96, %c0_4] : memref<104x32xf32, #tpu.memory_space<vmem>>, vector<1x32xf32>
    %c0_5 = arith.constant 0 : index
    %c0_6 = arith.constant 0 : index
    %4 = vector.load %arg3[%c0_5, %c0_6] : memref<64x8xf32, #tpu.memory_space<vmem>>, vector<64x8xf32>
    %5 = vector.extract_strided_slice %4 {offsets = [0, 0], sizes = [64, 1], strides = [1, 1]} : vector<64x8xf32> to vector<64x1xf32>
    %6 = vector.extract_strided_slice %4 {offsets = [0, 1], sizes = [32, 1], strides = [1, 1]} : vector<64x8xf32> to vector<32x1xf32>
    %7 = vector.extract_strided_slice %4 {offsets = [0, 2], sizes = [32, 1], strides = [1, 1]} : vector<64x8xf32> to vector<32x1xf32>
    %8 = vector.extract_strided_slice %4 {offsets = [0, 3], sizes = [32, 1], strides = [1, 1]} : vector<64x8xf32> to vector<32x1xf32>
    %9 = vector.extract_strided_slice %4 {offsets = [0, 4], sizes = [32, 1], strides = [1, 1]} : vector<64x8xf32> to vector<32x1xf32>
    %10 = vector.extract_strided_slice %4 {offsets = [0, 5], sizes = [32, 1], strides = [1, 1]} : vector<64x8xf32> to vector<32x1xf32>
    %11 = vector.extract_strided_slice %4 {offsets = [0, 6], sizes = [1, 1], strides = [1, 1]} : vector<64x8xf32> to vector<1x1xf32>
    %cst = arith.constant dense<0.000000e+00> : vector<64x128xf32>
    %12 = tpu.matmul %1, %0, %cst {dimension_numbers = #tpu.dot_dimension_numbers<[1], [0], [0], [1], [0, 0, 1, 1], [], []>} : vector<64x32xf32>, vector<32x128xf32>, vector<64x128xf32> -> vector<64x128xf32>
    %13 = vector.broadcast %5 : vector<64x1xf32> to vector<64x128xf32>
    %14 = arith.addf %12, %13 : vector<64x128xf32>
    %15 = vector.extract_strided_slice %14 {offsets = [0, 0], sizes = [32, 128], strides = [1, 1]} : vector<64x128xf32> to vector<32x128xf32>
    %16 = vector.extract_strided_slice %14 {offsets = [32, 0], sizes = [32, 128], strides = [1, 1]} : vector<64x128xf32> to vector<32x128xf32>
    %cst_7 = arith.constant 0.000000e+00 : f32
    %17 = vector.broadcast %cst_7 : f32 to vector<32x128xf32>
    %18 = arith.maximumf %16, %17 : vector<32x128xf32>
    %cst_8 = arith.constant 1.000000e+00 : f32
    %19 = vector.broadcast %cst_8 : f32 to vector<1x32xf32>
    %cst_9 = arith.constant dense<0.000000e+00> : vector<1x128xf32>
    %20 = tpu.matmul %19, %15, %cst_9 {dimension_numbers = #tpu.dot_dimension_numbers<[1], [0], [0], [1], [0, 0, 1, 1], [], []>} : vector<1x32xf32>, vector<32x128xf32>, vector<1x128xf32> -> vector<1x128xf32>
    %cst_10 = arith.constant 3.125000e-02 : f32
    %21 = vector.broadcast %cst_10 : f32 to vector<1x128xf32>
    %22 = arith.mulf %20, %21 : vector<1x128xf32>
    %23 = vector.broadcast %22 : vector<1x128xf32> to vector<32x128xf32>
    %24 = arith.subf %15, %23 : vector<32x128xf32>
    %25 = arith.mulf %24, %24 : vector<32x128xf32>
    %cst_11 = arith.constant dense<0.000000e+00> : vector<1x128xf32>
    %26 = tpu.matmul %19, %25, %cst_11 {dimension_numbers = #tpu.dot_dimension_numbers<[1], [0], [0], [1], [0, 0, 1, 1], [], []>} : vector<1x32xf32>, vector<32x128xf32>, vector<1x128xf32> -> vector<1x128xf32>
    %cst_12 = arith.constant 3.125000e-02 : f32
    %27 = vector.broadcast %cst_12 : f32 to vector<1x128xf32>
    %28 = arith.mulf %26, %27 : vector<1x128xf32>
    %cst_13 = arith.constant 9.99999974E-6 : f32
    %29 = vector.broadcast %cst_13 : f32 to vector<1x128xf32>
    %30 = arith.addf %28, %29 : vector<1x128xf32>
    %31 = math.rsqrt %30 : vector<1x128xf32>
    %32 = vector.broadcast %31 : vector<1x128xf32> to vector<32x128xf32>
    %33 = arith.mulf %24, %32 : vector<32x128xf32>
    %34 = vector.broadcast %6 : vector<32x1xf32> to vector<32x128xf32>
    %35 = arith.mulf %33, %34 : vector<32x128xf32>
    %36 = vector.broadcast %7 : vector<32x1xf32> to vector<32x128xf32>
    %37 = arith.addf %35, %36 : vector<32x128xf32>
    %cst_14 = arith.constant 0.000000e+00 : f32
    %38 = vector.broadcast %cst_14 : f32 to vector<32x128xf32>
    %39 = arith.maximumf %37, %38 : vector<32x128xf32>
    %cst_15 = arith.constant dense<0.000000e+00> : vector<32x128xf32>
    %40 = tpu.matmul %2, %39, %cst_15 {dimension_numbers = #tpu.dot_dimension_numbers<[1], [0], [0], [1], [0, 0, 1, 1], [], []>} : vector<32x32xf32>, vector<32x128xf32>, vector<32x128xf32> -> vector<32x128xf32>
    %41 = vector.broadcast %8 : vector<32x1xf32> to vector<32x128xf32>
    %42 = arith.addf %40, %41 : vector<32x128xf32>
    %cst_16 = arith.constant 1.000000e+00 : f32
    %43 = vector.broadcast %cst_16 : f32 to vector<1x32xf32>
    %cst_17 = arith.constant dense<0.000000e+00> : vector<1x128xf32>
    %44 = tpu.matmul %43, %42, %cst_17 {dimension_numbers = #tpu.dot_dimension_numbers<[1], [0], [0], [1], [0, 0, 1, 1], [], []>} : vector<1x32xf32>, vector<32x128xf32>, vector<1x128xf32> -> vector<1x128xf32>
    %cst_18 = arith.constant 3.125000e-02 : f32
    %45 = vector.broadcast %cst_18 : f32 to vector<1x128xf32>
    %46 = arith.mulf %44, %45 : vector<1x128xf32>
    %47 = vector.broadcast %46 : vector<1x128xf32> to vector<32x128xf32>
    %48 = arith.subf %42, %47 : vector<32x128xf32>
    %49 = arith.mulf %48, %48 : vector<32x128xf32>
    %cst_19 = arith.constant dense<0.000000e+00> : vector<1x128xf32>
    %50 = tpu.matmul %43, %49, %cst_19 {dimension_numbers = #tpu.dot_dimension_numbers<[1], [0], [0], [1], [0, 0, 1, 1], [], []>} : vector<1x32xf32>, vector<32x128xf32>, vector<1x128xf32> -> vector<1x128xf32>
    %cst_20 = arith.constant 3.125000e-02 : f32
    %51 = vector.broadcast %cst_20 : f32 to vector<1x128xf32>
    %52 = arith.mulf %50, %51 : vector<1x128xf32>
    %cst_21 = arith.constant 9.99999974E-6 : f32
    %53 = vector.broadcast %cst_21 : f32 to vector<1x128xf32>
    %54 = arith.addf %52, %53 : vector<1x128xf32>
    %55 = math.rsqrt %54 : vector<1x128xf32>
    %56 = vector.broadcast %55 : vector<1x128xf32> to vector<32x128xf32>
    %57 = arith.mulf %48, %56 : vector<32x128xf32>
    %58 = vector.broadcast %9 : vector<32x1xf32> to vector<32x128xf32>
    %59 = arith.mulf %57, %58 : vector<32x128xf32>
    %60 = vector.broadcast %10 : vector<32x1xf32> to vector<32x128xf32>
    %61 = arith.addf %59, %60 : vector<32x128xf32>
    %62 = arith.addf %61, %18 : vector<32x128xf32>
    %cst_22 = arith.constant 0.000000e+00 : f32
    %63 = vector.broadcast %cst_22 : f32 to vector<32x128xf32>
    %64 = arith.maximumf %62, %63 : vector<32x128xf32>
    %cst_23 = arith.constant dense<0.000000e+00> : vector<1x128xf32>
    %65 = tpu.matmul %3, %64, %cst_23 {dimension_numbers = #tpu.dot_dimension_numbers<[1], [0], [0], [1], [0, 0, 1, 1], [], []>} : vector<1x32xf32>, vector<32x128xf32>, vector<1x128xf32> -> vector<1x128xf32>
    %66 = vector.broadcast %11 : vector<1x1xf32> to vector<1x128xf32>
    %67 = arith.addf %65, %66 : vector<1x128xf32>
    %c0_24 = arith.constant 0 : index
    %c0_25 = arith.constant 0 : index
    %68 = vector.load %arg4[%c0_24, %c0_25] : memref<1x128xf32, #tpu.memory_space<vmem>>, vector<1x128xf32>
    tpu.vector_store %arg4[%c0_24, %c0_25], %67 {strides = array<i32>} : memref<1x128xf32, #tpu.memory_space<vmem>>, vector<1x128xf32>,
    return
  }
  func.func @transform_0(%arg0: i32) -> (i32, i32) {
    %c0_i32 = arith.constant 0 : i32
    %c0_i32_0 = arith.constant 0 : i32
    return %c0_i32, %arg0 : i32, i32
  }
  func.func @transform_1(%arg0: i32) -> (i32, i32) {
    %c0_i32 = arith.constant 0 : i32
    %c0_i32_0 = arith.constant 0 : i32
    %c0_i32_1 = arith.constant 0 : i32
    return %c0_i32, %c0_i32_0 : i32, i32
  }
  func.func @transform_2(%arg0: i32) -> (i32, i32) {
    %c0_i32 = arith.constant 0 : i32
    %c0_i32_0 = arith.constant 0 : i32
    %c0_i32_1 = arith.constant 0 : i32
    return %c0_i32, %c0_i32_0 : i32, i32
  }
  func.func @transform_3(%arg0: i32) -> (i32, i32) {
    %c0_i32 = arith.constant 0 : i32
    %c0_i32_0 = arith.constant 0 : i32
    return %c0_i32, %arg0 : i32, i32
  }
}

</mosaic_0001>

<llo_original>
// kernel: forward.1
$region0: #{forward.1}
  #allocation0 [shape = 'u32[]', space=smem, size = 0x4, offset = 0x4, fixed_abs, tag = 'smem constant byte address 0x4 - core index']
  #allocation1 [shape = 'u32[144,128]{1,0:T(1,128)}', space=vmem, size = 0x12000, scoped, tag = 'internal scratch']
  %s0 = inlined_call_operand.vmem [shape: f32[32,128], index: 0, kind: input, shape index: {}]
  %s1 = inlined_call_operand.vmem [shape: f32[104,32], index: 1, kind: input, shape index: {}]
  %s2 = inlined_call_operand.vmem [shape: f32[64,8], index: 2, kind: input, shape index: {}]
  %s3 = inlined_call_operand.vmem [shape: f32[1,128], index: 3, kind: output, shape index: {}]
  %s4 = sld [smem:[#allocation0]]
  $region22: #{forward.1} parent=0
    _
  %s6 = ssub.s32 1, %s4
  %s7 = scalar_select 0, %s6, %s4
  // Predicated region
  $region2: #{forward.1} parent=0 // pred_check
    _
  $region3: #{forward.1} parent=0 // pred_check_branch
    %9 = sbr.rel (0) target = $region5
  $region4: #{forward.1} parent=0 // pred_region
    _
  $region5: #{forward.1} parent=0 // pred_fallthru
    _
  // Predicated region
  $region6: #{forward.1} parent=0 // pred_check
    _
  $region7: #{forward.1} parent=0 // pred_check_branch
    %11 = sbr.rel (0) target = $region9
  $region8: #{forward.1} parent=0 // pred_region
    _
  $region9: #{forward.1} parent=0 // pred_fallthru
    _
  // Predicated region
  $region10: #{forward.1} parent=0 // pred_check
    _
  $region11: #{forward.1} parent=0 // pred_check_branch
    %13 = sbr.rel (0) target = $region13
  $region12: #{forward.1} parent=0 // pred_region
    _
  $region13: #{forward.1} parent=0 // pred_fallthru
    _
  %v14 = vld [vmem:[%s0] sm:$0xff]
  %v15 = vld [vmem:[%s0 + $0x8] sm:$0xff]
  %v16 = vld [vmem:[%s0 + $0x10] sm:$0xff]
  %v17 = vld [vmem:[%s0 + $0x18] sm:$0xff]
  %v18 = vld [vmem:[%s1] sm:$0xff]
  %v19 = vld [vmem:[%s1 + $0x8] sm:$0xff]
  %v20 = vld [vmem:[%s1 + $0x10] sm:$0xff]
  %v21 = vld [vmem:[%s1 + $0x18] sm:$0xff]
  %v22 = vld [vmem:[%s1 + $0x20] sm:$0xff]
  %v23 = vld [vmem:[%s1 + $0x28] sm:$0xff]
  %v24 = vld [vmem:[%s1 + $0x30] sm:$0xff]
  %v25 = vld [vmem:[%s1 + $0x38] sm:$0xff]
  %v26 = vld [vmem:[%s1 + $0x40] sm:$0xff]
  %v27 = vld [vmem:[%s1 + $0x48] sm:$0xff]
  %v28 = vld [vmem:[%s1 + $0x50] sm:$0xff]
  %v29 = vld [vmem:[%s1 + $0x58] sm:$0xff]
  %v30 = vld [vmem:[%s1 + $0x60] sm:$0x1]
  %v31 = vld [vmem:[%s2] sm:$0xff]
  %v32 = vld [vmem:[%s2 + $0x8] sm:$0xff]
  %v33 = vld [vmem:[%s2 + $0x10] sm:$0xff]
  %v34 = vld [vmem:[%s2 + $0x18] sm:$0xff]
  %v35 = vld [vmem:[%s2 + $0x20] sm:$0xff]
  %v36 = vld [vmem:[%s2 + $0x28] sm:$0xff]
  %v37 = vld [vmem:[%s2 + $0x30] sm:$0xff]
  %v38 = vld [vmem:[%s2 + $0x38] sm:$0xff]
  %40 = vset.pattern.permute.xlu0 0
  %41 = vperm.xlu0 %40, %v31
  %v42 = vpop.permute.xlu0 %41
  %45 = vset.pattern.permute.xlu0 0
  %46 = vperm.xlu0 %45, %v32
  %v47 = vpop.permute.xlu0 %46
  %50 = vset.pattern.permute.xlu0 0
  %51 = vperm.xlu0 %50, %v33
  %v52 = vpop.permute.xlu0 %51
  %55 = vset.pattern.permute.xlu0 0
  %56 = vperm.xlu0 %55, %v34
  %v57 = vpop.permute.xlu0 %56
  %60 = vset.pattern.permute.xlu0 0
  %61 = vperm.xlu0 %60, %v35
  %v62 = vpop.permute.xlu0 %61
  %65 = vset.pattern.permute.xlu0 0
  %66 = vperm.xlu0 %65, %v36
  %v67 = vpop.permute.xlu0 %66
  %70 = vset.pattern.permute.xlu0 0
  %71 = vperm.xlu0 %70, %v37
  %v72 = vpop.permute.xlu0 %71
  %75 = vset.pattern.permute.xlu0 0
  %76 = vperm.xlu0 %75, %v38
  %v77 = vpop.permute.xlu0 %76
  %vm79 = vcmask 261120
  %v81 = vsel %vm79, %v18, 0
  %v84 = vsel %vm79, %v19, 0
  %v87 = vsel %vm79, %v20, 0
  %v90 = vsel %vm79, %v21, 0
  %v93 = vsel %vm79, %v22, 0
  %v96 = vsel %vm79, %v23, 0
  %v99 = vsel %vm79, %v24, 0
  %v102 = vsel %vm79, %v25, 0
  %104 = vmatprep.subr.mxu0 0.0
  %105 = vmatpush1.msra.mxu0 %v14
  %106 = vmatprep.subr.mxu0 0.0
  %107 = vmatpush1.msra.mxu0 %v15
  %108 = vmatprep.subr.mxu0 0.0
  %109 = vmatpush1.msra.mxu0 %v16
  %110 = vmatprep.subr.mxu0 0.0
  %111 = vmatpush1.msra.mxu0 %v17
  %112 = vmatprep.subr.mxu0 0.0
  %113 = vmatpush1.msra.mxu0 0.0
  %114 = vmatprep.subr.mxu0 0.0
  %115 = vmatpush1.msra.mxu0 0.0
  %116 = vmatprep.subr.mxu0 0.0
  %117 = vmatpush1.msra.mxu0 0.0
  %118 = vmatprep.subr.mxu0 0.0
  %119 = vmatpush1.msra.mxu0 0.0
  %120 = vmatprep.subr.mxu0 0.0
  %121 = vmatpush1.msra.mxu0 0.0
  %122 = vmatprep.subr.mxu0 0.0
  %123 = vmatpush1.msra.mxu0 0.0
  %124 = vmatprep.subr.mxu0 0.0
  %125 = vmatpush1.msra.mxu0 0.0
  %126 = vmatprep.subr.mxu0 0.0
  %127 = vmatpush1.msra.mxu0 0.0
  %128 = vmatprep.subr.mxu0 0.0
  %129 = vmatpush1.msra.mxu0 0.0
  %130 = vmatprep.subr.mxu0 0.0
  %131 = vmatpush1.msra.mxu0 0.0
  %132 = vmatprep.subr.mxu0 0.0
  %133 = vmatpush1.msra.mxu0 0.0
  %134 = vmatprep.subr.mxu0 0.0
  %135 = vmatpush1.msra.mxu0 0.0
  %136 = vmatprep.subr.mxu0 0.0
  %137 = vmatpush1.msra.mxu0 0.0
  %138 = vmatprep.subr.mxu0 0.0
  %139 = vmatpush1.msra.mxu0 0.0
  %140 = vmatprep.subr.mxu0 0.0
  %141 = vmatpush1.msra.mxu0 0.0
  %142 = vmatprep.subr.mxu0 0.0
  %143 = vmatpush1.msra.mxu0 0.0
  %144 = vmatprep.subr.mxu0 0.0
  %145 = vmatpush1.msra.mxu0 0.0
  %146 = vmatprep.subr.mxu0 0.0
  %147 = vmatpush1.msra.mxu0 0.0
  %148 = vmatprep.subr.mxu0 0.0
  %149 = vmatpush1.msra.mxu0 0.0
  %150 = vmatprep.subr.mxu0 0.0
  %151 = vmatpush1.msra.mxu0 0.0
  %152 = vmatprep.subr.mxu0 0.0
  %153 = vmatpush1.msra.mxu0 0.0
  %154 = vmatprep.subr.mxu0 0.0
  %155 = vmatpush1.msra.mxu0 0.0
  %156 = vmatprep.subr.mxu0 0.0
  %157 = vmatpush1.msra.mxu0 0.0
  %158 = vmatprep.subr.mxu0 0.0
  %159 = vmatpush1.msra.mxu0 0.0
  %160 = vmatprep.subr.mxu0 0.0
  %161 = vmatpush1.msra.mxu0 0.0
  %162 = vmatprep.subr.mxu0 0.0
  %163 = vmatpush1.msra.mxu0 0.0
  %164 = vmatprep.subr.mxu0 0.0
  %165 = vmatpush1.msra.mxu0 0.0
  %166 = vmatprep.subr.mxu0 0.0
  %167 = vmatpush1.msra.mxu0 0.0
  %168 = vmatprep.mubr.f32.mxu0 0.0
  %169 = vmatmul.mubr.f32.gmra.mrb[0].mxu0 %v81
  %v170 = vpop.f32.mrb[0].mxu0
  %v171 = vadd.f32 %v42, %v170
  %v172 = vpop.f32.mrb[0].mxu0
  %173 = vmatprep.mubr.f32.mxu0 0.0
  %174 = vmatmul.mubr.f32.gmra.mrb[0].mxu0 %v84
  %v175 = vpop.f32.mrb[0].mxu0
  %v176 = vadd.f32 %v47, %v175
  %v177 = vpop.f32.mrb[0].mxu0
  %178 = vmatprep.mubr.f32.mxu0 0.0
  %179 = vmatmul.mubr.f32.gmra.mrb[0].mxu0 %v87
  %v180 = vpop.f32.mrb[0].mxu0
  %v181 = vadd.f32 %v52, %v180
  %v182 = vpop.f32.mrb[0].mxu0
  %183 = vmatprep.mubr.f32.mxu0 0.0
  %184 = vmatmul.mubr.f32.gmra.mrb[0].mxu0 %v90
  %v185 = vpop.f32.mrb[0].mxu0
  %v186 = vadd.f32 %v57, %v185
  %v187 = vpop.f32.mrb[0].mxu0
  %188 = vmatprep.mubr.f32.mxu0 0.0
  %189 = vmatmul.mubr.f32.gmra.mrb[0].mxu0 %v93
  %v190 = vpop.f32.mrb[0].mxu0
  %v191 = vadd.f32 %v62, %v190
  %v192 = vpop.f32.mrb[0].mxu0
  %193 = vmatprep.mubr.f32.mxu0 0.0
  %194 = vmatmul.mubr.f32.gmra.mrb[0].mxu0 %v96
  %v195 = vpop.f32.mrb[0].mxu0
  %v196 = vadd.f32 %v67, %v195
  %v197 = vpop.f32.mrb[0].mxu0
  %198 = vmatprep.mubr.f32.mxu0 0.0
  %199 = vmatmul.mubr.f32.gmra.mrb[0].mxu0 %v99
  %v200 = vpop.f32.mrb[0].mxu0
  %v201 = vadd.f32 %v72, %v200
  %v202 = vpop.f32.mrb[0].mxu0
  %203 = vmatprep.mubr.f32.mxu0 0.0
  %204 = vmatmul.mubr.f32.gmra.mrb[0].mxu0 %v102
  %v205 = vpop.f32.mrb[0].mxu0
  %v206 = vadd.f32 %v77, %v205
  %v207 = vpop.f32.mrb[0].mxu0
  %208 = vdwg.mxu0
  %v209 = vmax.f32 %v191, 0.0
  %v210 = vmax.f32 %v196, 0.0
  %v211 = vmax.f32 %v201, 0.0
  %v212 = vmax.f32 %v206, 0.0
  %v214 = vsel %vm79, 1.0, 0
  %216 = vmatprep.subr.mxu0 0.0
  %217 = vmatpush1.msra.mxu0 %v171
  %218 = vmatprep.subr.mxu0 0.0
  %219 = vmatpush1.msra.mxu0 %v176
  %220 = vmatprep.subr.mxu0 0.0
  %221 = vmatpush1.msra.mxu0 %v181
  %222 = vmatprep.subr.mxu0 0.0
  %223 = vmatpush1.msra.mxu0 %v186
  %224 = vmatprep.subr.mxu0 0.0
  %225 = vmatpush1.msra.mxu0 0.0
  %226 = vmatprep.subr.mxu0 0.0
  %227 = vmatpush1.msra.mxu0 0.0
  %228 = vmatprep.subr.mxu0 0.0
  %229 = vmatpush1.msra.mxu0 0.0
  %230 = vmatprep.subr.mxu0 0.0
  %231 = vmatpush1.msra.mxu0 0.0
  %232 = vmatprep.subr.mxu0 0.0
  %233 = vmatpush1.msra.mxu0 0.0
  %234 = vmatprep.subr.mxu0 0.0
  %235 = vmatpush1.msra.mxu0 0.0
  %236 = vmatprep.subr.mxu0 0.0
  %237 = vmatpush1.msra.mxu0 0.0
  %238 = vmatprep.subr.mxu0 0.0
  %239 = vmatpush1.msra.mxu0 0.0
  %240 = vmatprep.subr.mxu0 0.0
  %241 = vmatpush1.msra.mxu0 0.0
  %242 = vmatprep.subr.mxu0 0.0
  %243 = vmatpush1.msra.mxu0 0.0
  %244 = vmatprep.subr.mxu0 0.0
  %245 = vmatpush1.msra.mxu0 0.0
  %246 = vmatprep.subr.mxu0 0.0
  %247 = vmatpush1.msra.mxu0 0.0
  %248 = vmatprep.subr.mxu0 0.0
  %249 = vmatpush1.msra.mxu0 0.0
  %250 = vmatprep.subr.mxu0 0.0
  %251 = vmatpush1.msra.mxu0 0.0
  %252 = vmatprep.subr.mxu0 0.0
  %253 = vmatpush1.msra.mxu0 0.0
  %254 = vmatprep.subr.mxu0 0.0
  %255 = vmatpush1.msra.mxu0 0.0
  %256 = vmatprep.subr.mxu0 0.0
  %257 = vmatpush1.msra.mxu0 0.0
  %258 = vmatprep.subr.mxu0 0.0
  %259 = vmatpush1.msra.mxu0 0.0
  %260 = vmatprep.subr.mxu0 0.0
  %261 = vmatpush1.msra.mxu0 0.0
  %262 = vmatprep.subr.mxu0 0.0
  %263 = vmatpush1.msra.mxu0 0.0
  %264 = vmatprep.subr.mxu0 0.0
  %265 = vmatpush1.msra.mxu0 0.0
  %266 = vmatprep.subr.mxu0 0.0
  %267 = vmatpush1.msra.mxu0 0.0
  %268 = vmatprep.subr.mxu0 0.0
  %269 = vmatpush1.msra.mxu0 0.0
  %270 = vmatprep.subr.mxu0 0.0
  %271 = vmatpush1.msra.mxu0 0.0
  %272 = vmatprep.subr.mxu0 0.0
  %273 = vmatpush1.msra.mxu0 0.0
  %274 = vmatprep.subr.mxu0 0.0
  %275 = vmatpush1.msra.mxu0 0.0
  %276 = vmatprep.subr.mxu0 0.0
  %277 = vmatpush1.msra.mxu0 0.0
  %278 = vmatprep.subr.mxu0 0.0
  %279 = vmatpush1.msra.mxu0 0.0
  %280 = vmatprep.mubr.f32.mxu0 0.0
  %281 = vmatmul.mubr.f32.gmra.mrb[0].mxu0 %v214
  %v282 = vpop.f32.mrb[0].mxu0
  %v283 = vadd.f32 0.0, %v282
  %v284 = vpop.f32.mrb[0].mxu0
  %285 = vdwg.mxu0
  %v286 = vmul.f32 %v283, 0.03125
  %v287 = vlaneseq
  %v288 = vshrl.u32 %v287, 7
  %v289 = vsub.s32 0, %v288
  %v290 = vrot.slane %v286, %v289
  %v291 = vsub.f32 %v171, %v290
  %v292 = vsub.f32 %v176, %v290
  %v293 = vsub.f32 %v181, %v290
  %v294 = vsub.f32 %v186, %v290
  %v295 = vmul.f32 %v291, %v291
  %v296 = vmul.f32 %v292, %v292
  %v297 = vmul.f32 %v293, %v293
  %v298 = vmul.f32 %v294, %v294
  %299 = vmatprep.subr.mxu0 0.0
  %300 = vmatpush1.msra.mxu0 %v295
  %301 = vmatprep.subr.mxu0 0.0
  %302 = vmatpush1.msra.mxu0 %v296
  %303 = vmatprep.subr.mxu0 0.0
  %304 = vmatpush1.msra.mxu0 %v297
  %305 = vmatprep.subr.mxu0 0.0
  %306 = vmatpush1.msra.mxu0 %v298
  %307 = vmatprep.subr.mxu0 0.0
  %308 = vmatpush1.msra.mxu0 0.0
  %309 = vmatprep.subr.mxu0 0.0
  %310 = vmatpush1.msra.mxu0 0.0
  %311 = vmatprep.subr.mxu0 0.0
  %312 = vmatpush1.msra.mxu0 0.0
  %313 = vmatprep.subr.mxu0 0.0
  %314 = vmatpush1.msra.mxu0 0.0
  %315 = vmatprep.subr.mxu0 0.0
  %316 = vmatpush1.msra.mxu0 0.0
  %317 = vmatprep.subr.mxu0 0.0
  %318 = vmatpush1.msra.mxu0 0.0
  %319 = vmatprep.subr.mxu0 0.0
  %320 = vmatpush1.msra.mxu0 0.0
  %321 = vmatprep.subr.mxu0 0.0
  %322 = vmatpush1.msra.mxu0 0.0
  %323 = vmatprep.subr.mxu0 0.0
  %324 = vmatpush1.msra.mxu0 0.0
  %325 = vmatprep.subr.mxu0 0.0
  %326 = vmatpush1.msra.mxu0 0.0
  %327 = vmatprep.subr.mxu0 0.0
  %328 = vmatpush1.msra.mxu0 0.0
  %329 = vmatprep.subr.mxu0 0.0
  %330 = vmatpush1.msra.mxu0 0.0
  %331 = vmatprep.subr.mxu0 0.0
  %332 = vmatpush1.msra.mxu0 0.0
  %333 = vmatprep.subr.mxu0 0.0
  %334 = vmatpush1.msra.mxu0 0.0
  %335 = vmatprep.subr.mxu0 0.0
  %336 = vmatpush1.msra.mxu0 0.0
  %337 = vmatprep.subr.mxu0 0.0
  %338 = vmatpush1.msra.mxu0 0.0
  %339 = vmatprep.subr.mxu0 0.0
  %340 = vmatpush1.msra.mxu0 0.0
  %341 = vmatprep.subr.mxu0 0.0
  %342 = vmatpush1.msra.mxu0 0.0
  %343 = vmatprep.subr.mxu0 0.0
  %344 = vmatpush1.msra.mxu0 0.0
  %345 = vmatprep.subr.mxu0 0.0
  %346 = vmatpush1.msra.mxu0 0.0
  %347 = vmatprep.subr.mxu0 0.0
  %348 = vmatpush1.msra.mxu0 0.0
  %349 = vmatprep.subr.mxu0 0.0
  %350 = vmatpush1.msra.mxu0 0.0
  %351 = vmatprep.subr.mxu0 0.0
  %352 = vmatpush1.msra.mxu0 0.0
  %353 = vmatprep.subr.mxu0 0.0
  %354 = vmatpush1.msra.mxu0 0.0
  %355 = vmatprep.subr.mxu0 0.0
  %356 = vmatpush1.msra.mxu0 0.0
  %357 = vmatprep.subr.mxu0 0.0
  %358 = vmatpush1.msra.mxu0 0.0
  %359 = vmatprep.subr.mxu0 0.0
  %360 = vmatpush1.msra.mxu0 0.0
  %361 = vmatprep.subr.mxu0 0.0
  %362 = vmatpush1.msra.mxu0 0.0
  %363 = vmatprep.mubr.f32.mxu0 0.0
  %364 = vmatmul.mubr.f32.gmra.mrb[0].mxu0 %v214
  %v365 = vpop.f32.mrb[0].mxu0
  %v366 = vadd.f32 0.0, %v365
  %v367 = vpop.f32.mrb[0].mxu0
  %368 = vdwg.mxu0
  %v369 = vmul.f32 %v366, 0.03125
  %v370 = vadd.f32 %v369, 1e-05
  %v371 = vrsqrt.pop %v370
  %v372 = vlaneseq
  %v373 = vshrl.u32 %v372, 7
  %v374 = vsub.s32 0, %v373
  %v375 = vrot.slane %v371, %v374
  %v376 = vmul.f32 %v291, %v375
  %v377 = vmul.f32 %v292, %v375
  %v378 = vmul.f32 %v293, %v375
  %v379 = vmul.f32 %v294, %v375
  %380 = vset.pattern.permute.xlu0 1
  %381 = vperm.xlu0 %380, %v31
  %v382 = vpop.permute.xlu0 %381
  %384 = vset.pattern.permute.xlu0 1
  %385 = vperm.xlu0 %384, %v32
  %v386 = vpop.permute.xlu0 %385
  %388 = vset.pattern.permute.xlu0 1
  %389 = vperm.xlu0 %388, %v33
  %v390 = vpop.permute.xlu0 %389
  %392 = vset.pattern.permute.xlu0 1
  %393 = vperm.xlu0 %392, %v34
  %v394 = vpop.permute.xlu0 %393
  %v396 = vmul.f32 %v376, %v382
  %v397 = vmul.f32 %v377, %v386
  %v398 = vmul.f32 %v378, %v390
  %v399 = vmul.f32 %v379, %v394
  %400 = vset.pattern.permute.xlu0 2
  %401 = vperm.xlu0 %400, %v31
  %v402 = vpop.permute.xlu0 %401
  %404 = vset.pattern.permute.xlu0 2
  %405 = vperm.xlu0 %404, %v32
  %v406 = vpop.permute.xlu0 %405
  %408 = vset.pattern.permute.xlu0 2
  %409 = vperm.xlu0 %408, %v33
  %v410 = vpop.permute.xlu0 %409
  %412 = vset.pattern.permute.xlu0 2
  %413 = vperm.xlu0 %412, %v34
  %v414 = vpop.permute.xlu0 %413
  %v416 = vadd.f32 %v396, %v402
  %v417 = vadd.f32 %v397, %v406
  %v418 = vadd.f32 %v398, %v410
  %v419 = vadd.f32 %v399, %v414
  %v420 = vmax.f32 %v416, 0.0
  %v421 = vmax.f32 %v417, 0.0
  %v422 = vmax.f32 %v418, 0.0
  %v423 = vmax.f32 %v419, 0.0
  %424 = vset.pattern.permute.xlu0 3
  %425 = vperm.xlu0 %424, %v31
  %v426 = vpop.permute.xlu0 %425
  %428 = vset.pattern.permute.xlu0 3
  %429 = vperm.xlu0 %428, %v32
  %v430 = vpop.permute.xlu0 %429
  %432 = vset.pattern.permute.xlu0 3
  %433 = vperm.xlu0 %432, %v33
  %v434 = vpop.permute.xlu0 %433
  %436 = vset.pattern.permute.xlu0 3
  %437 = vperm.xlu0 %436, %v34
  %v438 = vpop.permute.xlu0 %437
  %v441 = vsel %vm79, %v26, 0
  %v444 = vsel %vm79, %v27, 0
  %v447 = vsel %vm79, %v28, 0
  %v450 = vsel %vm79, %v29, 0
  %452 = vmatprep.subr.mxu0 0.0
  %453 = vmatpush1.msra.mxu0 %v420
  %454 = vmatprep.subr.mxu0 0.0
  %455 = vmatpush1.msra.mxu0 %v421
  %456 = vmatprep.subr.mxu0 0.0
  %457 = vmatpush1.msra.mxu0 %v422
  %458 = vmatprep.subr.mxu0 0.0
  %459 = vmatpush1.msra.mxu0 %v423
  %460 = vmatprep.subr.mxu0 0.0
  %461 = vmatpush1.msra.mxu0 0.0
  %462 = vmatprep.subr.mxu0 0.0
  %463 = vmatpush1.msra.mxu0 0.0
  %464 = vmatprep.subr.mxu0 0.0
  %465 = vmatpush1.msra.mxu0 0.0
  %466 = vmatprep.subr.mxu0 0.0
  %467 = vmatpush1.msra.mxu0 0.0
  %468 = vmatprep.subr.mxu0 0.0
  %469 = vmatpush1.msra.mxu0 0.0
  %470 = vmatprep.subr.mxu0 0.0
  %471 = vmatpush1.msra.mxu0 0.0
  %472 = vmatprep.subr.mxu0 0.0
  %473 = vmatpush1.msra.mxu0 0.0
  %474 = vmatprep.subr.mxu0 0.0
  %475 = vmatpush1.msra.mxu0 0.0
  %476 = vmatprep.subr.mxu0 0.0
  %477 = vmatpush1.msra.mxu0 0.0
  %478 = vmatprep.subr.mxu0 0.0
  %479 = vmatpush1.msra.mxu0 0.0
  %480 = vmatprep.subr.mxu0 0.0
  %481 = vmatpush1.msra.mxu0 0.0
  %482 = vmatprep.subr.mxu0 0.0
  %483 = vmatpush1.msra.mxu0 0.0
  %484 = vmatprep.subr.mxu0 0.0
  %485 = vmatpush1.msra.mxu0 0.0
  %486 = vmatprep.subr.mxu0 0.0
  %487 = vmatpush1.msra.mxu0 0.0
  %488 = vmatprep.subr.mxu0 0.0
  %489 = vmatpush1.msra.mxu0 0.0
  %490 = vmatprep.subr.mxu0 0.0
  %491 = vmatpush1.msra.mxu0 0.0
  %492 = vmatprep.subr.mxu0 0.0
  %493 = vmatpush1.msra.mxu0 0.0
  %494 = vmatprep.subr.mxu0 0.0
  %495 = vmatpush1.msra.mxu0 0.0
  %496 = vmatprep.subr.mxu0 0.0
  %497 = vmatpush1.msra.mxu0 0.0
  %498 = vmatprep.subr.mxu0 0.0
  %499 = vmatpush1.msra.mxu0 0.0
  %500 = vmatprep.subr.mxu0 0.0
  %501 = vmatpush1.msra.mxu0 0.0
  %502 = vmatprep.subr.mxu0 0.0
  %503 = vmatpush1.msra.mxu0 0.0
  %504 = vmatprep.subr.mxu0 0.0
  %505 = vmatpush1.msra.mxu0 0.0
  %506 = vmatprep.subr.mxu0 0.0
  %507 = vmatpush1.msra.mxu0 0.0
  %508 = vmatprep.subr.mxu0 0.0
  %509 = vmatpush1.msra.mxu0 0.0
  %510 = vmatprep.subr.mxu0 0.0
  %511 = vmatpush1.msra.mxu0 0.0
  %512 = vmatprep.subr.mxu0 0.0
  %513 = vmatpush1.msra.mxu0 0.0
  %514 = vmatprep.subr.mxu0 0.0
  %515 = vmatpush1.msra.mxu0 0.0
  %516 = vmatprep.mubr.f32.mxu0 0.0
  %517 = vmatmul.mubr.f32.gmra.mrb[0].mxu0 %v441
  %v518 = vpop.f32.mrb[0].mxu0
  %v519 = vadd.f32 %v426, %v518
  %v520 = vpop.f32.mrb[0].mxu0
  %521 = vmatprep.mubr.f32.mxu0 0.0
  %522 = vmatmul.mubr.f32.gmra.mrb[0].mxu0 %v444
  %v523 = vpop.f32.mrb[0].mxu0
  %v524 = vadd.f32 %v430, %v523
  %v525 = vpop.f32.mrb[0].mxu0
  %526 = vmatprep.mubr.f32.mxu0 0.0
  %527 = vmatmul.mubr.f32.gmra.mrb[0].mxu0 %v447
  %v528 = vpop.f32.mrb[0].mxu0
  %v529 = vadd.f32 %v434, %v528
  %v530 = vpop.f32.mrb[0].mxu0
  %531 = vmatprep.mubr.f32.mxu0 0.0
  %532 = vmatmul.mubr.f32.gmra.mrb[0].mxu0 %v450
  %v533 = vpop.f32.mrb[0].mxu0
  %v534 = vadd.f32 %v438, %v533
  %v535 = vpop.f32.mrb[0].mxu0
  %536 = vdwg.mxu0
  %537 = vmatprep.subr.mxu0 0.0
  %538 = vmatpush1.msra.mxu0 %v519
  %539 = vmatprep.subr.mxu0 0.0
  %540 = vmatpush1.msra.mxu0 %v524
  %541 = vmatprep.subr.mxu0 0.0
  %542 = vmatpush1.msra.mxu0 %v529
  %543 = vmatprep.subr.mxu0 0.0
  %544 = vmatpush1.msra.mxu0 %v534
  %545 = vmatprep.subr.mxu0 0.0
  %546 = vmatpush1.msra.mxu0 0.0
  %547 = vmatprep.subr.mxu0 0.0
  %548 = vmatpush1.msra.mxu0 0.0
  %549 = vmatprep.subr.mxu0 0.0
  %550 = vmatpush1.msra.mxu0 0.0
  %551 = vmatprep.subr.mxu0 0.0
  %552 = vmatpush1.msra.mxu0 0.0
  %553 = vmatprep.subr.mxu0 0.0
  %554 = vmatpush1.msra.mxu0 0.0
  %555 = vmatprep.subr.mxu0 0.0
  %556 = vmatpush1.msra.mxu0 0.0
  %557 = vmatprep.subr.mxu0 0.0
  %558 = vmatpush1.msra.mxu0 0.0
  %559 = vmatprep.subr.mxu0 0.0
  %560 = vmatpush1.msra.mxu0 0.0
  %561 = vmatprep.subr.mxu0 0.0
  %562 = vmatpush1.msra.mxu0 0.0
  %563 = vmatprep.subr.mxu0 0.0
  %564 = vmatpush1.msra.mxu0 0.0
  %565 = vmatprep.subr.mxu0 0.0
  %566 = vmatpush1.msra.mxu0 0.0
  %567 = vmatprep.subr.mxu0 0.0
  %568 = vmatpush1.msra.mxu0 0.0
  %569 = vmatprep.subr.mxu0 0.0
  %570 = vmatpush1.msra.mxu0 0.0
  %571 = vmatprep.subr.mxu0 0.0
  %572 = vmatpush1.msra.mxu0 0.0
  %573 = vmatprep.subr.mxu0 0.0
  %574 = vmatpush1.msra.mxu0 0.0
  %575 = vmatprep.subr.mxu0 0.0
  %576 = vmatpush1.msra.mxu0 0.0
  %577 = vmatprep.subr.mxu0 0.0
  %578 = vmatpush1.msra.mxu0 0.0
  %579 = vmatprep.subr.mxu0 0.0
  %580 = vmatpush1.msra.mxu0 0.0
  %581 = vmatprep.subr.mxu0 0.0
  %582 = vmatpush1.msra.mxu0 0.0
  %583 = vmatprep.subr.mxu0 0.0
  %584 = vmatpush1.msra.mxu0 0.0
  %585 = vmatprep.subr.mxu0 0.0
  %586 = vmatpush1.msra.mxu0 0.0
  %587 = vmatprep.subr.mxu0 0.0
  %588 = vmatpush1.msra.mxu0 0.0
  %589 = vmatprep.subr.mxu0 0.0
  %590 = vmatpush1.msra.mxu0 0.0
  %591 = vmatprep.subr.mxu0 0.0
  %592 = vmatpush1.msra.mxu0 0.0
  %593 = vmatprep.subr.mxu0 0.0
  %594 = vmatpush1.msra.mxu0 0.0
  %595 = vmatprep.subr.mxu0 0.0
  %596 = vmatpush1.msra.mxu0 0.0
  %597 = vmatprep.subr.mxu0 0.0
  %598 = vmatpush1.msra.mxu0 0.0
  %599 = vmatprep.subr.mxu0 0.0
  %600 = vmatpush1.msra.mxu0 0.0
  %601 = vmatprep.mubr.f32.mxu0 0.0
  %602 = vmatmul.mubr.f32.gmra.mrb[0].mxu0 %v214
  %v603 = vpop.f32.mrb[0].mxu0
  %v604 = vadd.f32 0.0, %v603
  %v605 = vpop.f32.mrb[0].mxu0
  %606 = vdwg.mxu0
  %v607 = vmul.f32 %v604, 0.03125
  %v608 = vlaneseq
  %v609 = vshrl.u32 %v608, 7
  %v610 = vsub.s32 0, %v609
  %v611 = vrot.slane %v607, %v610
  %v612 = vsub.f32 %v519, %v611
  %v613 = vsub.f32 %v524, %v611
  %v614 = vsub.f32 %v529, %v611
  %v615 = vsub.f32 %v534, %v611
  %v616 = vmul.f32 %v612, %v612
  %v617 = vmul.f32 %v613, %v613
  %v618 = vmul.f32 %v614, %v614
  %v619 = vmul.f32 %v615, %v615
  %620 = vmatprep.subr.mxu0 0.0
  %621 = vmatpush1.msra.mxu0 %v616
  %622 = vmatprep.subr.mxu0 0.0
  %623 = vmatpush1.msra.mxu0 %v617
  %624 = vmatprep.subr.mxu0 0.0
  %625 = vmatpush1.msra.mxu0 %v618
  %626 = vmatprep.subr.mxu0 0.0
  %627 = vmatpush1.msra.mxu0 %v619
  %628 = vmatprep.subr.mxu0 0.0
  %629 = vmatpush1.msra.mxu0 0.0
  %630 = vmatprep.subr.mxu0 0.0
  %631 = vmatpush1.msra.mxu0 0.0
  %632 = vmatprep.subr.mxu0 0.0
  %633 = vmatpush1.msra.mxu0 0.0
  %634 = vmatprep.subr.mxu0 0.0
  %635 = vmatpush1.msra.mxu0 0.0
  %636 = vmatprep.subr.mxu0 0.0
  %637 = vmatpush1.msra.mxu0 0.0
  %638 = vmatprep.subr.mxu0 0.0
  %639 = vmatpush1.msra.mxu0 0.0
  %640 = vmatprep.subr.mxu0 0.0
  %641 = vmatpush1.msra.mxu0 0.0
  %642 = vmatprep.subr.mxu0 0.0
  %643 = vmatpush1.msra.mxu0 0.0
  %644 = vmatprep.subr.mxu0 0.0
  %645 = vmatpush1.msra.mxu0 0.0
  %646 = vmatprep.subr.mxu0 0.0
  %647 = vmatpush1.msra.mxu0 0.0
  %648 = vmatprep.subr.mxu0 0.0
  %649 = vmatpush1.msra.mxu0 0.0
  %650 = vmatprep.subr.mxu0 0.0
  %651 = vmatpush1.msra.mxu0 0.0
  %652 = vmatprep.subr.mxu0 0.0
  %653 = vmatpush1.msra.mxu0 0.0
  %654 = vmatprep.subr.mxu0 0.0
  %655 = vmatpush1.msra.mxu0 0.0
  %656 = vmatprep.subr.mxu0 0.0
  %657 = vmatpush1.msra.mxu0 0.0
  %658 = vmatprep.subr.mxu0 0.0
  %659 = vmatpush1.msra.mxu0 0.0
  %660 = vmatprep.subr.mxu0 0.0
  %661 = vmatpush1.msra.mxu0 0.0
  %662 = vmatprep.subr.mxu0 0.0
  %663 = vmatpush1.msra.mxu0 0.0
  %664 = vmatprep.subr.mxu0 0.0
  %665 = vmatpush1.msra.mxu0 0.0
  %666 = vmatprep.subr.mxu0 0.0
  %667 = vmatpush1.msra.mxu0 0.0
  %668 = vmatprep.subr.mxu0 0.0
  %669 = vmatpush1.msra.mxu0 0.0
  %670 = vmatprep.subr.mxu0 0.0
  %671 = vmatpush1.msra.mxu0 0.0
  %672 = vmatprep.subr.mxu0 0.0
  %673 = vmatpush1.msra.mxu0 0.0
  %674 = vmatprep.subr.mxu0 0.0
  %675 = vmatpush1.msra.mxu0 0.0
  %676 = vmatprep.subr.mxu0 0.0
  %677 = vmatpush1.msra.mxu0 0.0
  %678 = vmatprep.subr.mxu0 0.0
  %679 = vmatpush1.msra.mxu0 0.0
  %680 = vmatprep.subr.mxu0 0.0
  %681 = vmatpush1.msra.mxu0 0.0
  %682 = vmatprep.subr.mxu0 0.0
  %683 = vmatpush1.msra.mxu0 0.0
  %684 = vmatprep.mubr.f32.mxu0 0.0
  %685 = vmatmul.mubr.f32.gmra.mrb[0].mxu0 %v214
  %v686 = vpop.f32.mrb[0].mxu0
  %v687 = vadd.f32 0.0, %v686
  %v688 = vpop.f32.mrb[0].mxu0
  %689 = vdwg.mxu0
  %v690 = vmul.f32 %v687, 0.03125
  %v691 = vadd.f32 %v690, 1e-05
  %v692 = vrsqrt.pop %v691
  %v693 = vlaneseq
  %v694 = vshrl.u32 %v693, 7
  %v695 = vsub.s32 0, %v694
  %v696 = vrot.slane %v692, %v695
  %v697 = vmul.f32 %v612, %v696
  %v698 = vmul.f32 %v613, %v696
  %v699 = vmul.f32 %v614, %v696
  %v700 = vmul.f32 %v615, %v696
  %701 = vset.pattern.permute.xlu0 4
  %702 = vperm.xlu0 %701, %v31
  %v703 = vpop.permute.xlu0 %702
  %705 = vset.pattern.permute.xlu0 4
  %706 = vperm.xlu0 %705, %v32
  %v707 = vpop.permute.xlu0 %706
  %709 = vset.pattern.permute.xlu0 4
  %710 = vperm.xlu0 %709, %v33
  %v711 = vpop.permute.xlu0 %710
  %713 = vset.pattern.permute.xlu0 4
  %714 = vperm.xlu0 %713, %v34
  %v715 = vpop.permute.xlu0 %714
  %v717 = vmul.f32 %v697, %v703
  %v718 = vmul.f32 %v698, %v707
  %v719 = vmul.f32 %v699, %v711
  %v720 = vmul.f32 %v700, %v715
  %721 = vset.pattern.permute.xlu0 5
  %722 = vperm.xlu0 %721, %v31
  %v723 = vpop.permute.xlu0 %722
  %725 = vset.pattern.permute.xlu0 5
  %726 = vperm.xlu0 %725, %v32
  %v727 = vpop.permute.xlu0 %726
  %729 = vset.pattern.permute.xlu0 5
  %730 = vperm.xlu0 %729, %v33
  %v731 = vpop.permute.xlu0 %730
  %733 = vset.pattern.permute.xlu0 5
  %734 = vperm.xlu0 %733, %v34
  %v735 = vpop.permute.xlu0 %734
  %v737 = vadd.f32 %v717, %v723
  %v738 = vadd.f32 %v718, %v727
  %v739 = vadd.f32 %v719, %v731
  %v740 = vadd.f32 %v720, %v735
  %v741 = vadd.f32 %v737, %v209
  %v742 = vadd.f32 %v738, %v210
  %v743 = vadd.f32 %v739, %v211
  %v744 = vadd.f32 %v740, %v212
  %v745 = vmax.f32 %v741, 0.0
  %v746 = vmax.f32 %v742, 0.0
  %v747 = vmax.f32 %v743, 0.0
  %v748 = vmax.f32 %v744, 0.0
  %749 = vset.pattern.permute.xlu0 6
  %750 = vperm.xlu0 %749, %v31
  %v751 = vpop.permute.xlu0 %750
  %v754 = vsel %vm79, %v30, 0
  %756 = vmatprep.subr.mxu0 0.0
  %757 = vmatpush1.msra.mxu0 %v745
  %758 = vmatprep.subr.mxu0 0.0
  %759 = vmatpush1.msra.mxu0 %v746
  %760 = vmatprep.subr.mxu0 0.0
  %761 = vmatpush1.msra.mxu0 %v747
  %762 = vmatprep.subr.mxu0 0.0
  %763 = vmatpush1.msra.mxu0 %v748
  %764 = vmatprep.subr.mxu0 0.0
  %765 = vmatpush1.msra.mxu0 0.0
  %766 = vmatprep.subr.mxu0 0.0
  %767 = vmatpush1.msra.mxu0 0.0
  %768 = vmatprep.subr.mxu0 0.0
  %769 = vmatpush1.msra.mxu0 0.0
  %770 = vmatprep.subr.mxu0 0.0
  %771 = vmatpush1.msra.mxu0 0.0
  %772 = vmatprep.subr.mxu0 0.0
  %773 = vmatpush1.msra.mxu0 0.0
  %774 = vmatprep.subr.mxu0 0.0
  %775 = vmatpush1.msra.mxu0 0.0
  %776 = vmatprep.subr.mxu0 0.0
  %777 = vmatpush1.msra.mxu0 0.0
  %778 = vmatprep.subr.mxu0 0.0
  %779 = vmatpush1.msra.mxu0 0.0
  %780 = vmatprep.subr.mxu0 0.0
  %781 = vmatpush1.msra.mxu0 0.0
  %782 = vmatprep.subr.mxu0 0.0
  %783 = vmatpush1.msra.mxu0 0.0
  %784 = vmatprep.subr.mxu0 0.0
  %785 = vmatpush1.msra.mxu0 0.0
  %786 = vmatprep.subr.mxu0 0.0
  %787 = vmatpush1.msra.mxu0 0.0
  %788 = vmatprep.subr.mxu0 0.0
  %789 = vmatpush1.msra.mxu0 0.0
  %790 = vmatprep.subr.mxu0 0.0
  %791 = vmatpush1.msra.mxu0 0.0
  %792 = vmatprep.subr.mxu0 0.0
  %793 = vmatpush1.msra.mxu0 0.0
  %794 = vmatprep.subr.mxu0 0.0
  %795 = vmatpush1.msra.mxu0 0.0
  %796 = vmatprep.subr.mxu0 0.0
  %797 = vmatpush1.msra.mxu0 0.0
  %798 = vmatprep.subr.mxu0 0.0
  %799 = vmatpush1.msra.mxu0 0.0
  %800 = vmatprep.subr.mxu0 0.0
  %801 = vmatpush1.msra.mxu0 0.0
  %802 = vmatprep.subr.mxu0 0.0
  %803 = vmatpush1.msra.mxu0 0.0
  %804 = vmatprep.subr.mxu0 0.0
  %805 = vmatpush1.msra.mxu0 0.0
  %806 = vmatprep.subr.mxu0 0.0
  %807 = vmatpush1.msra.mxu0 0.0
  %808 = vmatprep.subr.mxu0 0.0
  %809 = vmatpush1.msra.mxu0 0.0
  %810 = vmatprep.subr.mxu0 0.0
  %811 = vmatpush1.msra.mxu0 0.0
  %812 = vmatprep.subr.mxu0 0.0
  %813 = vmatpush1.msra.mxu0 0.0
  %814 = vmatprep.subr.mxu0 0.0
  %815 = vmatpush1.msra.mxu0 0.0
  %816 = vmatprep.subr.mxu0 0.0
  %817 = vmatpush1.msra.mxu0 0.0
  %818 = vmatprep.subr.mxu0 0.0
  %819 = vmatpush1.msra.mxu0 0.0
  %820 = vmatprep.mubr.f32.mxu0 0.0
  %821 = vmatmul.mubr.f32.gmra.mrb[0].mxu0 %v754
  %v822 = vpop.f32.mrb[0].mxu0
  %v823 = vadd.f32 %v751, %v822
  %v824 = vpop.f32.mrb[0].mxu0
  %825 = vdwg.mxu0
  %826 = vst [vmem:[%s3] sm:$0x1] %v823
  // Predicated region
  $region14: #{forward.1} parent=0 // pred_check
    _
  $region15: #{forward.1} parent=0 // pred_check_branch
    %828 = sbr.rel (0) target = $region17
  $region16: #{forward.1} parent=0 // pred_region
    _
  $region17: #{forward.1} parent=0 // pred_fallthru
    _
  // Predicated region
  $region18: #{forward.1} parent=0 // pred_check
    _
  $region19: #{forward.1} parent=0 // pred_check_branch
    %830 = sbr.rel (0) target = $region21
  $region20: #{forward.1} parent=0 // pred_region
    _
  $region21: #{forward.1} parent=0 // pred_fallthru
    _

</llo_original>
